<compile_context>
chip_gen: v7x
topology: tpu7x:2x2x1
jax: 0.10.0
libtpu: 0.0.40
codegen_flags: <defaults>
</compile_context>

<pallas_src>
import functools

import jax
import jax.numpy as jnp
import numpy as np
from jax import lax
from jax.experimental import pallas as pl
from jax.experimental.pallas import tpu as pltpu

LANES = 128
SUBLANES = 8
# (4096, 128) f32 tile = 2 MiB; 2 inputs x 2 pipeline buffers = 8 MiB, which
# fits the default scoped VMEM on v5e (16 MiB) and v6e/v7x (32 MiB) while
# amortizing per-grid-step overhead to <10% of each step.
DEFAULT_TILE_ROWS = 4096
# First grid axis is "parallel": v7x's two TensorCores each stream half the
# reduction; on 1-TC chips (v5e/v6e) it is simply an outer loop.
NUM_CORES = 2


def _plcc_moments_kernel(x_ref, y_ref,
                         sx_ref, sy_ref, sxx_ref, syy_ref, sxy_ref,
                         *, rows, tile_rows, steps_per_core, full_blocks):
    c = pl.program_id(0)              # "core" (parallel) index
    k = pl.program_id(1)              # reduction step within this core
    step = c * steps_per_core + k     # linear row-block index

    @pl.when(k == 0)
    def _init():
        sx_ref[...] = jnp.zeros_like(sx_ref)
        sy_ref[...] = jnp.zeros_like(sy_ref)
        sxx_ref[...] = jnp.zeros_like(sxx_ref)
        syy_ref[...] = jnp.zeros_like(syy_ref)
        sxy_ref[...] = jnp.zeros_like(sxy_ref)

    def _accumulate(x, y):
        # (tile_rows, 128) -> (tile_rows//8, 8, 128); summing axis 0 is pure
        # vreg-wise VALU adds into resident (8, 128) accumulators.  The
        # cross-sublane / cross-lane reduce is deferred to the JAX epilogue.
        xg = x.reshape(-1, SUBLANES, LANES)
        yg = y.reshape(-1, SUBLANES, LANES)
        sx_ref[...] += xg.sum(axis=0)
        sy_ref[...] += yg.sum(axis=0)
        sxx_ref[...] += (xg * xg).sum(axis=0)
        syy_ref[...] += (yg * yg).sum(axis=0)
        sxy_ref[...] += (xg * yg).sum(axis=0)

    @pl.when(step < full_blocks)
    def _full():                      # hot path: fully-valid block, no masking
        _accumulate(x_ref[...].astype(jnp.float32),
                    y_ref[...].astype(jnp.float32))

    @pl.when(step == full_blocks)
    def _tail():                      # boundary block: mask rows >= `rows`
        row = lax.broadcasted_iota(jnp.int32, (tile_rows, LANES), 0)
        valid = row < (rows - step * tile_rows)
        x = jnp.where(valid, x_ref[...].astype(jnp.float32), 0.0)
        y = jnp.where(valid, y_ref[...].astype(jnp.float32), 0.0)
        _accumulate(x, y)
    # Steps with step > full_blocks (padded grid steps whose index_map was
    # clamped) fall through both branches and contribute nothing.


def plcc_loss(pred, target, *, tile_rows=None, num_cores=NUM_CORES):
    assert pred.shape == target.shape, "input/target must have identical shapes"
    n = int(np.prod(pred.shape))
    assert n > 0
    itemsize = jnp.dtype(pred.dtype).itemsize

    rows = pl.cdiv(n, LANES)
    if n == rows * LANES and rows >= SUBLANES:
        # Free path: a reshape of a contiguous array costs no HBM traffic.
        xf = jnp.reshape(pred, (rows, LANES))
        yf = jnp.reshape(target, (rows, LANES))
    else:
        # TODO(synk): numel not a multiple of 128 (or tiny inputs) forces a flat
        # zero-pad copy; zero padding contributes nothing to any raw moment.
        rows = ((rows + SUBLANES - 1) // SUBLANES) * SUBLANES
        pad = rows * LANES - n
        xf = jnp.pad(jnp.ravel(pred), (0, pad)).reshape(rows, LANES)
        yf = jnp.pad(jnp.ravel(target), (0, pad)).reshape(rows, LANES)

    if tile_rows is None:
        tile_rows = DEFAULT_TILE_ROWS
    # Row tile: multiple of 8 sublanes, never larger than the array's rows.
    tr = min(int(tile_rows), (rows // SUBLANES) * SUBLANES)
    tr = max(SUBLANES, (tr // SUBLANES) * SUBLANES)

    total_blocks = pl.cdiv(rows, tr)
    full_blocks = rows // tr                      # blocks needing no row mask
    nc = max(1, min(int(num_cores), total_blocks))
    steps = pl.cdiv(total_blocks, nc)

    def in_map(c, k):
        # Clamp so padded grid steps (when total_blocks % nc != 0) stay within
        # the array; the kernel skips their contribution based on `step`.
        return (jnp.minimum(c * steps + k, total_blocks - 1), 0)

    moment_shape = jax.ShapeDtypeStruct((nc, SUBLANES, LANES), jnp.float32)
    moment_spec = pl.BlockSpec((None, SUBLANES, LANES), lambda c, k: (c, 0, 0))

    kernel = functools.partial(
        _plcc_moments_kernel,
        rows=rows, tile_rows=tr, steps_per_core=steps, full_blocks=full_blocks)

    sx_p, sy_p, sxx_p, syy_p, sxy_p = pl.pallas_call(
        kernel,
        out_shape=(moment_shape,) * 5,
        grid=(nc, steps),
        in_specs=[
            pl.BlockSpec((tr, LANES), in_map),
            pl.BlockSpec((tr, LANES), in_map),
        ],
        out_specs=(moment_spec,) * 5,
        compiler_params=pltpu.CompilerParams(
            dimension_semantics=("parallel", "arbitrary")),
        cost_estimate=pl.CostEstimate(
            flops=8 * n, transcendentals=0, bytes_accessed=2 * n * itemsize),
    )(xf, yf)

    # Tiny cross-core / cross-sublane / cross-lane combine + scalar epilogue.
    sx = jnp.sum(sx_p)
    sy = jnp.sum(sy_p)
    sxx = jnp.sum(sxx_p)
    syy = jnp.sum(syy_p)
    sxy = jnp.sum(sxy_p)

    inv_n = 1.0 / float(n)
    num = sxy - sx * sy * inv_n
    # Clamp at 0 so f32 cancellation in the raw-moment form can never push the
    # variances slightly negative and NaN the sqrt.
    vx = jnp.maximum(sxx - sx * sx * inv_n, 0.0)
    vy = jnp.maximum(syy - sy * sy * inv_n, 0.0)
    return num / (jnp.sqrt(vx) * jnp.sqrt(vy))


def plcc_loss_ref(pred, target):
    x = pred.astype(jnp.float32)
    y = target.astype(jnp.float32)
    x0 = x - jnp.mean(x)
    y0 = y - jnp.mean(y)
    return jnp.sum(x0 * y0) / (
        jnp.sqrt(jnp.sum(x0 ** 2)) * jnp.sqrt(jnp.sum(y0 ** 2))
    )


if __name__ == "__main__":
    key = jax.random.PRNGKey(0)
    k1, k2 = jax.random.split(key)

    # Case 1: small batch of predicted / target quality maps (2, 4, 16, 16).
    # tile_rows=8 forces a 2-block reduction split across the 2-way "parallel"
    # axis, exercising init / accumulate / per-core partial combine.
    pred = jax.random.normal(k1, (2, 4, 16, 16), dtype=jnp.float32)
    target = 0.7 * pred + 0.3 * jax.random.normal(k2, (2, 4, 16, 16),
                                                  dtype=jnp.float32)
    loss = plcc_loss(pred, target, tile_rows=8)
    jax.block_until_ready(loss)
    ref = plcc_loss_ref(pred, target)
    assert np.allclose(np.asarray(loss), np.asarray(ref),
                       rtol=1e-5, atol=1e-6), (float(loss), float(ref))

    # Case 2: numel % 128 != 0 exercises the minimal zero-pad fallback.
    p2 = jax.random.normal(k1, (3, 5, 7), dtype=jnp.float32)
    t2 = jax.random.normal(k2, (3, 5, 7), dtype=jnp.float32)
    loss2 = plcc_loss(p2, t2, tile_rows=8)
    jax.block_until_ready(loss2)
    ref2 = plcc_loss_ref(p2, t2)
    assert np.allclose(np.asarray(loss2), np.asarray(ref2),
                       rtol=1e-5, atol=1e-6), (float(loss2), float(ref2))

    # Case 3: odd block count (3 blocks over 2 "cores") exercises the clamped
    # padded grid step that must contribute nothing.
    p3 = jax.random.normal(k1, (3, 8, 128), dtype=jnp.float32)
    t3 = 0.5 * p3 + 0.5 * jax.random.normal(k2, (3, 8, 128), dtype=jnp.float32)
    loss3 = plcc_loss(p3, t3, tile_rows=8)
    jax.block_until_ready(loss3)
    ref3 = plcc_loss_ref(p3, t3)
    assert np.allclose(np.asarray(loss3), np.asarray(ref3),
                       rtol=1e-5, atol=1e-6), (float(loss3), float(ref3))

    print("KERNEL_OK")
</pallas_src>

<mosaic_0001>
module attributes {stable_mosaic.version = 11 : i64} {
  func.func @_plcc_moments_kernel(%arg0: i32, %arg1: i32, %arg2: memref<8x128xf32, #tpu.memory_space<vmem>>, %arg3: memref<8x128xf32, #tpu.memory_space<vmem>>, %arg4: memref<1x8x128xf32, #tpu.memory_space<vmem>>, %arg5: memref<1x8x128xf32, #tpu.memory_space<vmem>>, %arg6: memref<1x8x128xf32, #tpu.memory_space<vmem>>, %arg7: memref<1x8x128xf32, #tpu.memory_space<vmem>>, %arg8: memref<1x8x128xf32, #tpu.memory_space<vmem>>) attributes {dimension_semantics = [#tpu.dimension_semantics<parallel>, #tpu.dimension_semantics<arbitrary>], iteration_bounds = array<i64: 2, 1>, scalar_prefetch = 0 : i64, scratch_operands = 0 : i64, tpu.core_type = #tpu.core_type<tc>, window_params = [{transform_indices = @transform_0, window_bounds = array<i64: 8, 128>}, {transform_indices = @transform_1, window_bounds = array<i64: 8, 128>}, {transform_indices = @transform_2, window_bounds = array<i64: 1, 8, 128>}, {transform_indices = @transform_3, window_bounds = array<i64: 1, 8, 128>}, {transform_indices = @transform_4, window_bounds = array<i64: 1, 8, 128>}, {transform_indices = @transform_5, window_bounds = array<i64: 1, 8, 128>}, {transform_indices = @transform_6, window_bounds = array<i64: 1, 8, 128>}]} {
    %c1_i32 = arith.constant 1 : i32
    %0 = arith.muli %arg0, %c1_i32 : i32
    %1 = arith.addi %0, %arg1 : i32
    %c0_i32 = arith.constant 0 : i32
    %2 = arith.cmpi eq, %arg1, %c0_i32 : i32
    %3 = arith.extui %2 : i1 to i32
    %c0_i32_0 = arith.constant 0 : i32
    %4 = arith.cmpi ne, %3, %c0_i32_0 : i32
    scf.if %4 {
      %cst = arith.constant 0.000000e+00 : f32
      %11 = vector.broadcast %cst : f32 to vector<8x128xf32>
      %c0 = arith.constant 0 : index
      %c0_4 = arith.constant 0 : index
      %c0_5 = arith.constant 0 : index
      %12 = vector.load %arg4[%c0, %c0_4, %c0_5] : memref<1x8x128xf32, #tpu.memory_space<vmem>>, vector<1x8x128xf32>
      %13 = vector.shape_cast %12 : vector<1x8x128xf32> to vector<8x128xf32>
      %14 = vector.shape_cast %11 : vector<8x128xf32> to vector<1x8x128xf32>
      tpu.vector_store %arg4[%c0, %c0_4, %c0_5], %14 {strides = array<i32>} : memref<1x8x128xf32, #tpu.memory_space<vmem>>, vector<1x8x128xf32>,
      %cst_6 = arith.constant 0.000000e+00 : f32
      %15 = vector.broadcast %cst_6 : f32 to vector<8x128xf32>
      %c0_7 = arith.constant 0 : index
      %c0_8 = arith.constant 0 : index
      %c0_9 = arith.constant 0 : index
      %16 = vector.load %arg5[%c0_7, %c0_8, %c0_9] : memref<1x8x128xf32, #tpu.memory_space<vmem>>, vector<1x8x128xf32>
      %17 = vector.shape_cast %16 : vector<1x8x128xf32> to vector<8x128xf32>
      %18 = vector.shape_cast %15 : vector<8x128xf32> to vector<1x8x128xf32>
      tpu.vector_store %arg5[%c0_7, %c0_8, %c0_9], %18 {strides = array<i32>} : memref<1x8x128xf32, #tpu.memory_space<vmem>>, vector<1x8x128xf32>,
      %cst_10 = arith.constant 0.000000e+00 : f32
      %19 = vector.broadcast %cst_10 : f32 to vector<8x128xf32>
      %c0_11 = arith.constant 0 : index
      %c0_12 = arith.constant 0 : index
      %c0_13 = arith.constant 0 : index
      %20 = vector.load %arg6[%c0_11, %c0_12, %c0_13] : memref<1x8x128xf32, #tpu.memory_space<vmem>>, vector<1x8x128xf32>
      %21 = vector.shape_cast %20 : vector<1x8x128xf32> to vector<8x128xf32>
      %22 = vector.shape_cast %19 : vector<8x128xf32> to vector<1x8x128xf32>
      tpu.vector_store %arg6[%c0_11, %c0_12, %c0_13], %22 {strides = array<i32>} : memref<1x8x128xf32, #tpu.memory_space<vmem>>, vector<1x8x128xf32>,
      %cst_14 = arith.constant 0.000000e+00 : f32
      %23 = vector.broadcast %cst_14 : f32 to vector<8x128xf32>
      %c0_15 = arith.constant 0 : index
      %c0_16 = arith.constant 0 : index
      %c0_17 = arith.constant 0 : index
      %24 = vector.load %arg7[%c0_15, %c0_16, %c0_17] : memref<1x8x128xf32, #tpu.memory_space<vmem>>, vector<1x8x128xf32>
      %25 = vector.shape_cast %24 : vector<1x8x128xf32> to vector<8x128xf32>
      %26 = vector.shape_cast %23 : vector<8x128xf32> to vector<1x8x128xf32>
      tpu.vector_store %arg7[%c0_15, %c0_16, %c0_17], %26 {strides = array<i32>} : memref<1x8x128xf32, #tpu.memory_space<vmem>>, vector<1x8x128xf32>,
      %cst_18 = arith.constant 0.000000e+00 : f32
      %27 = vector.broadcast %cst_18 : f32 to vector<8x128xf32>
      %c0_19 = arith.constant 0 : index
      %c0_20 = arith.constant 0 : index
      %c0_21 = arith.constant 0 : index
      %28 = vector.load %arg8[%c0_19, %c0_20, %c0_21] : memref<1x8x128xf32, #tpu.memory_space<vmem>>, vector<1x8x128xf32>
      %29 = vector.shape_cast %28 : vector<1x8x128xf32> to vector<8x128xf32>
      %30 = vector.shape_cast %27 : vector<8x128xf32> to vector<1x8x128xf32>
      tpu.vector_store %arg8[%c0_19, %c0_20, %c0_21], %30 {strides = array<i32>} : memref<1x8x128xf32, #tpu.memory_space<vmem>>, vector<1x8x128xf32>,
    } else {
    }
    %c2_i32 = arith.constant 2 : i32
    %5 = arith.cmpi slt, %1, %c2_i32 : i32
    %6 = arith.extui %5 : i1 to i32
    %c0_i32_1 = arith.constant 0 : i32
    %7 = arith.cmpi ne, %6, %c0_i32_1 : i32
    scf.if %7 {
      %c0 = arith.constant 0 : index
      %c0_4 = arith.constant 0 : index
      %11 = vector.load %arg2[%c0, %c0_4] : memref<8x128xf32, #tpu.memory_space<vmem>>, vector<8x128xf32>
      %c0_5 = arith.constant 0 : index
      %c0_6 = arith.constant 0 : index
      %12 = vector.load %arg3[%c0_5, %c0_6] : memref<8x128xf32, #tpu.memory_space<vmem>>, vector<8x128xf32>
      %13 = vector.shape_cast %11 : vector<8x128xf32> to vector<1x8x128xf32>
      %14 = vector.shape_cast %12 : vector<8x128xf32> to vector<1x8x128xf32>
      %c0_7 = arith.constant 0 : index
      %c0_8 = arith.constant 0 : index
      %c0_9 = arith.constant 0 : index
      %15 = vector.load %arg4[%c0_7, %c0_8, %c0_9] : memref<1x8x128xf32, #tpu.memory_space<vmem>>, vector<1x8x128xf32>
      %16 = vector.shape_cast %15 : vector<1x8x128xf32> to vector<8x128xf32>
      %cst = arith.constant dense<0.000000e+00> : vector<8x128xf32>
      %17 = vector.multi_reduction <add>, %13, %cst [0] : vector<1x8x128xf32> to vector<8x128xf32>
      %18 = arith.addf %16, %17 : vector<8x128xf32>
      %c0_10 = arith.constant 0 : index
      %c0_11 = arith.constant 0 : index
      %c0_12 = arith.constant 0 : index
      %19 = vector.load %arg4[%c0_10, %c0_11, %c0_12] : memref<1x8x128xf32, #tpu.memory_space<vmem>>, vector<1x8x128xf32>
      %20 = vector.shape_cast %19 : vector<1x8x128xf32> to vector<8x128xf32>
      %21 = vector.shape_cast %18 : vector<8x128xf32> to vector<1x8x128xf32>
      tpu.vector_store %arg4[%c0_10, %c0_11, %c0_12], %21 {strides = array<i32>} : memref<1x8x128xf32, #tpu.memory_space<vmem>>, vector<1x8x128xf32>,
      %c0_13 = arith.constant 0 : index
      %c0_14 = arith.constant 0 : index
      %c0_15 = arith.constant 0 : index
      %22 = vector.load %arg5[%c0_13, %c0_14, %c0_15] : memref<1x8x128xf32, #tpu.memory_space<vmem>>, vector<1x8x128xf32>
      %23 = vector.shape_cast %22 : vector<1x8x128xf32> to vector<8x128xf32>
      %cst_16 = arith.constant dense<0.000000e+00> : vector<8x128xf32>
      %24 = vector.multi_reduction <add>, %14, %cst_16 [0] : vector<1x8x128xf32> to vector<8x128xf32>
      %25 = arith.addf %23, %24 : vector<8x128xf32>
      %c0_17 = arith.constant 0 : index
      %c0_18 = arith.constant 0 : index
      %c0_19 = arith.constant 0 : index
      %26 = vector.load %arg5[%c0_17, %c0_18, %c0_19] : memref<1x8x128xf32, #tpu.memory_space<vmem>>, vector<1x8x128xf32>
      %27 = vector.shape_cast %26 : vector<1x8x128xf32> to vector<8x128xf32>
      %28 = vector.shape_cast %25 : vector<8x128xf32> to vector<1x8x128xf32>
      tpu.vector_store %arg5[%c0_17, %c0_18, %c0_19], %28 {strides = array<i32>} : memref<1x8x128xf32, #tpu.memory_space<vmem>>, vector<1x8x128xf32>,
      %c0_20 = arith.constant 0 : index
      %c0_21 = arith.constant 0 : index
      %c0_22 = arith.constant 0 : index
      %29 = vector.load %arg6[%c0_20, %c0_21, %c0_22] : memref<1x8x128xf32, #tpu.memory_space<vmem>>, vector<1x8x128xf32>
      %30 = vector.shape_cast %29 : vector<1x8x128xf32> to vector<8x128xf32>
      %31 = arith.mulf %13, %13 : vector<1x8x128xf32>
      %cst_23 = arith.constant dense<0.000000e+00> : vector<8x128xf32>
      %32 = vector.multi_reduction <add>, %31, %cst_23 [0] : vector<1x8x128xf32> to vector<8x128xf32>
      %33 = arith.addf %30, %32 : vector<8x128xf32>
      %c0_24 = arith.constant 0 : index
      %c0_25 = arith.constant 0 : index
      %c0_26 = arith.constant 0 : index
      %34 = vector.load %arg6[%c0_24, %c0_25, %c0_26] : memref<1x8x128xf32, #tpu.memory_space<vmem>>, vector<1x8x128xf32>
      %35 = vector.shape_cast %34 : vector<1x8x128xf32> to vector<8x128xf32>
      %36 = vector.shape_cast %33 : vector<8x128xf32> to vector<1x8x128xf32>
      tpu.vector_store %arg6[%c0_24, %c0_25, %c0_26], %36 {strides = array<i32>} : memref<1x8x128xf32, #tpu.memory_space<vmem>>, vector<1x8x128xf32>,
      %c0_27 = arith.constant 0 : index
      %c0_28 = arith.constant 0 : index
      %c0_29 = arith.constant 0 : index
      %37 = vector.load %arg7[%c0_27, %c0_28, %c0_29] : memref<1x8x128xf32, #tpu.memory_space<vmem>>, vector<1x8x128xf32>
      %38 = vector.shape_cast %37 : vector<1x8x128xf32> to vector<8x128xf32>
      %39 = arith.mulf %14, %14 : vector<1x8x128xf32>
      %cst_30 = arith.constant dense<0.000000e+00> : vector<8x128xf32>
      %40 = vector.multi_reduction <add>, %39, %cst_30 [0] : vector<1x8x128xf32> to vector<8x128xf32>
      %41 = arith.addf %38, %40 : vector<8x128xf32>
      %c0_31 = arith.constant 0 : index
      %c0_32 = arith.constant 0 : index
      %c0_33 = arith.constant 0 : index
      %42 = vector.load %arg7[%c0_31, %c0_32, %c0_33] : memref<1x8x128xf32, #tpu.memory_space<vmem>>, vector<1x8x128xf32>
      %43 = vector.shape_cast %42 : vector<1x8x128xf32> to vector<8x128xf32>
      %44 = vector.shape_cast %41 : vector<8x128xf32> to vector<1x8x128xf32>
      tpu.vector_store %arg7[%c0_31, %c0_32, %c0_33], %44 {strides = array<i32>} : memref<1x8x128xf32, #tpu.memory_space<vmem>>, vector<1x8x128xf32>,
      %c0_34 = arith.constant 0 : index
      %c0_35 = arith.constant 0 : index
      %c0_36 = arith.constant 0 : index
      %45 = vector.load %arg8[%c0_34, %c0_35, %c0_36] : memref<1x8x128xf32, #tpu.memory_space<vmem>>, vector<1x8x128xf32>
      %46 = vector.shape_cast %45 : vector<1x8x128xf32> to vector<8x128xf32>
      %47 = arith.mulf %13, %14 : vector<1x8x128xf32>
      %cst_37 = arith.constant dense<0.000000e+00> : vector<8x128xf32>
      %48 = vector.multi_reduction <add>, %47, %cst_37 [0] : vector<1x8x128xf32> to vector<8x128xf32>
      %49 = arith.addf %46, %48 : vector<8x128xf32>
      %c0_38 = arith.constant 0 : index
      %c0_39 = arith.constant 0 : index
      %c0_40 = arith.constant 0 : index
      %50 = vector.load %arg8[%c0_38, %c0_39, %c0_40] : memref<1x8x128xf32, #tpu.memory_space<vmem>>, vector<1x8x128xf32>
      %51 = vector.shape_cast %50 : vector<1x8x128xf32> to vector<8x128xf32>
      %52 = vector.shape_cast %49 : vector<8x128xf32> to vector<1x8x128xf32>
      tpu.vector_store %arg8[%c0_38, %c0_39, %c0_40], %52 {strides = array<i32>} : memref<1x8x128xf32, #tpu.memory_space<vmem>>, vector<1x8x128xf32>,
    } else {
    }
    %c2_i32_2 = arith.constant 2 : i32
    %8 = arith.cmpi eq, %1, %c2_i32_2 : i32
    %9 = arith.extui %8 : i1 to i32
    %c0_i32_3 = arith.constant 0 : i32
    %10 = arith.cmpi ne, %9, %c0_i32_3 : i32
    scf.if %10 {
      %11 = tpu.iota {dimensions = array<i32: 0>} : vector<8x128xi32>
      %c8_i32 = arith.constant 8 : i32
      %12 = arith.muli %1, %c8_i32 : i32
      %c16_i32 = arith.constant 16 : i32
      %13 = arith.subi %c16_i32, %12 : i32
      %14 = vector.broadcast %13 : i32 to vector<8x128xi32>
      %15 = arith.cmpi slt, %11, %14 : vector<8x128xi32>
      %c0 = arith.constant 0 : index
      %c0_4 = arith.constant 0 : index
      %16 = vector.load %arg2[%c0, %c0_4] : memref<8x128xf32, #tpu.memory_space<vmem>>, vector<8x128xf32>
      %cst = arith.constant 0.000000e+00 : f32
      %17 = vector.broadcast %cst : f32 to vector<8x128xf32>
      %18 = arith.select %15, %16, %17 : vector<8x128xi1>, vector<8x128xf32>
      %c0_5 = arith.constant 0 : index
      %c0_6 = arith.constant 0 : index
      %19 = vector.load %arg3[%c0_5, %c0_6] : memref<8x128xf32, #tpu.memory_space<vmem>>, vector<8x128xf32>
      %cst_7 = arith.constant 0.000000e+00 : f32
      %20 = vector.broadcast %cst_7 : f32 to vector<8x128xf32>
      %21 = arith.select %15, %19, %20 : vector<8x128xi1>, vector<8x128xf32>
      %22 = vector.shape_cast %18 : vector<8x128xf32> to vector<1x8x128xf32>
      %23 = vector.shape_cast %21 : vector<8x128xf32> to vector<1x8x128xf32>
      %c0_8 = arith.constant 0 : index
      %c0_9 = arith.constant 0 : index
      %c0_10 = arith.constant 0 : index
      %24 = vector.load %arg4[%c0_8, %c0_9, %c0_10] : memref<1x8x128xf32, #tpu.memory_space<vmem>>, vector<1x8x128xf32>
      %25 = vector.shape_cast %24 : vector<1x8x128xf32> to vector<8x128xf32>
      %cst_11 = arith.constant dense<0.000000e+00> : vector<8x128xf32>
      %26 = vector.multi_reduction <add>, %22, %cst_11 [0] : vector<1x8x128xf32> to vector<8x128xf32>
      %27 = arith.addf %25, %26 : vector<8x128xf32>
      %c0_12 = arith.constant 0 : index
      %c0_13 = arith.constant 0 : index
      %c0_14 = arith.constant 0 : index
      %28 = vector.load %arg4[%c0_12, %c0_13, %c0_14] : memref<1x8x128xf32, #tpu.memory_space<vmem>>, vector<1x8x128xf32>
      %29 = vector.shape_cast %28 : vector<1x8x128xf32> to vector<8x128xf32>
      %30 = vector.shape_cast %27 : vector<8x128xf32> to vector<1x8x128xf32>
      tpu.vector_store %arg4[%c0_12, %c0_13, %c0_14], %30 {strides = array<i32>} : memref<1x8x128xf32, #tpu.memory_space<vmem>>, vector<1x8x128xf32>,
      %c0_15 = arith.constant 0 : index
      %c0_16 = arith.constant 0 : index
      %c0_17 = arith.constant 0 : index
      %31 = vector.load %arg5[%c0_15, %c0_16, %c0_17] : memref<1x8x128xf32, #tpu.memory_space<vmem>>, vector<1x8x128xf32>
      %32 = vector.shape_cast %31 : vector<1x8x128xf32> to vector<8x128xf32>
      %cst_18 = arith.constant dense<0.000000e+00> : vector<8x128xf32>
      %33 = vector.multi_reduction <add>, %23, %cst_18 [0] : vector<1x8x128xf32> to vector<8x128xf32>
      %34 = arith.addf %32, %33 : vector<8x128xf32>
      %c0_19 = arith.constant 0 : index
      %c0_20 = arith.constant 0 : index
      %c0_21 = arith.constant 0 : index
      %35 = vector.load %arg5[%c0_19, %c0_20, %c0_21] : memref<1x8x128xf32, #tpu.memory_space<vmem>>, vector<1x8x128xf32>
      %36 = vector.shape_cast %35 : vector<1x8x128xf32> to vector<8x128xf32>
      %37 = vector.shape_cast %34 : vector<8x128xf32> to vector<1x8x128xf32>
      tpu.vector_store %arg5[%c0_19, %c0_20, %c0_21], %37 {strides = array<i32>} : memref<1x8x128xf32, #tpu.memory_space<vmem>>, vector<1x8x128xf32>,
      %c0_22 = arith.constant 0 : index
      %c0_23 = arith.constant 0 : index
      %c0_24 = arith.constant 0 : index
      %38 = vector.load %arg6[%c0_22, %c0_23, %c0_24] : memref<1x8x128xf32, #tpu.memory_space<vmem>>, vector<1x8x128xf32>
      %39 = vector.shape_cast %38 : vector<1x8x128xf32> to vector<8x128xf32>
      %40 = arith.mulf %22, %22 : vector<1x8x128xf32>
      %cst_25 = arith.constant dense<0.000000e+00> : vector<8x128xf32>
      %41 = vector.multi_reduction <add>, %40, %cst_25 [0] : vector<1x8x128xf32> to vector<8x128xf32>
      %42 = arith.addf %39, %41 : vector<8x128xf32>
      %c0_26 = arith.constant 0 : index
      %c0_27 = arith.constant 0 : index
      %c0_28 = arith.constant 0 : index
      %43 = vector.load %arg6[%c0_26, %c0_27, %c0_28] : memref<1x8x128xf32, #tpu.memory_space<vmem>>, vector<1x8x128xf32>
      %44 = vector.shape_cast %43 : vector<1x8x128xf32> to vector<8x128xf32>
      %45 = vector.shape_cast %42 : vector<8x128xf32> to vector<1x8x128xf32>
      tpu.vector_store %arg6[%c0_26, %c0_27, %c0_28], %45 {strides = array<i32>} : memref<1x8x128xf32, #tpu.memory_space<vmem>>, vector<1x8x128xf32>,
      %c0_29 = arith.constant 0 : index
      %c0_30 = arith.constant 0 : index
      %c0_31 = arith.constant 0 : index
      %46 = vector.load %arg7[%c0_29, %c0_30, %c0_31] : memref<1x8x128xf32, #tpu.memory_space<vmem>>, vector<1x8x128xf32>
      %47 = vector.shape_cast %46 : vector<1x8x128xf32> to vector<8x128xf32>
      %48 = arith.mulf %23, %23 : vector<1x8x128xf32>
      %cst_32 = arith.constant dense<0.000000e+00> : vector<8x128xf32>
      %49 = vector.multi_reduction <add>, %48, %cst_32 [0] : vector<1x8x128xf32> to vector<8x128xf32>
      %50 = arith.addf %47, %49 : vector<8x128xf32>
      %c0_33 = arith.constant 0 : index
      %c0_34 = arith.constant 0 : index
      %c0_35 = arith.constant 0 : index
      %51 = vector.load %arg7[%c0_33, %c0_34, %c0_35] : memref<1x8x128xf32, #tpu.memory_space<vmem>>, vector<1x8x128xf32>
      %52 = vector.shape_cast %51 : vector<1x8x128xf32> to vector<8x128xf32>
      %53 = vector.shape_cast %50 : vector<8x128xf32> to vector<1x8x128xf32>
      tpu.vector_store %arg7[%c0_33, %c0_34, %c0_35], %53 {strides = array<i32>} : memref<1x8x128xf32, #tpu.memory_space<vmem>>, vector<1x8x128xf32>,
      %c0_36 = arith.constant 0 : index
      %c0_37 = arith.constant 0 : index
      %c0_38 = arith.constant 0 : index
      %54 = vector.load %arg8[%c0_36, %c0_37, %c0_38] : memref<1x8x128xf32, #tpu.memory_space<vmem>>, vector<1x8x128xf32>
      %55 = vector.shape_cast %54 : vector<1x8x128xf32> to vector<8x128xf32>
      %56 = arith.mulf %22, %23 : vector<1x8x128xf32>
      %cst_39 = arith.constant dense<0.000000e+00> : vector<8x128xf32>
      %57 = vector.multi_reduction <add>, %56, %cst_39 [0] : vector<1x8x128xf32> to vector<8x128xf32>
      %58 = arith.addf %55, %57 : vector<8x128xf32>
      %c0_40 = arith.constant 0 : index
      %c0_41 = arith.constant 0 : index
      %c0_42 = arith.constant 0 : index
      %59 = vector.load %arg8[%c0_40, %c0_41, %c0_42] : memref<1x8x128xf32, #tpu.memory_space<vmem>>, vector<1x8x128xf32>
      %60 = vector.shape_cast %59 : vector<1x8x128xf32> to vector<8x128xf32>
      %61 = vector.shape_cast %58 : vector<8x128xf32> to vector<1x8x128xf32>
      tpu.vector_store %arg8[%c0_40, %c0_41, %c0_42], %61 {strides = array<i32>} : memref<1x8x128xf32, #tpu.memory_space<vmem>>, vector<1x8x128xf32>,
    } else {
    }
    return
  }
  func.func @transform_0(%arg0: i32, %arg1: i32) -> (i32, i32) {
    %c1_i32 = arith.constant 1 : i32
    %0 = arith.muli %arg0, %c1_i32 : i32
    %1 = arith.addi %0, %arg1 : i32
    %c1_i32_0 = arith.constant 1 : i32
    %2 = arith.minsi %1, %c1_i32_0 : i32
    %c0_i32 = arith.constant 0 : i32
    %c0_i32_1 = arith.constant 0 : i32
    return %2, %c0_i32 : i32, i32
  }
  func.func @transform_1(%arg0: i32, %arg1: i32) -> (i32, i32) {
    %c1_i32 = arith.constant 1 : i32
    %0 = arith.muli %arg0, %c1_i32 : i32
    %1 = arith.addi %0, %arg1 : i32
    %c1_i32_0 = arith.constant 1 : i32
    %2 = arith.minsi %1, %c1_i32_0 : i32
    %c0_i32 = arith.constant 0 : i32
    %c0_i32_1 = arith.constant 0 : i32
    return %2, %c0_i32 : i32, i32
  }
  func.func @transform_2(%arg0: i32, %arg1: i32) -> (i32, i32, i32) {
    %c0_i32 = arith.constant 0 : i32
    %c0_i32_0 = arith.constant 0 : i32
    %c0_i32_1 = arith.constant 0 : i32
    return %arg0, %c0_i32, %c0_i32_0 : i32, i32, i32
  }
  func.func @transform_3(%arg0: i32, %arg1: i32) -> (i32, i32, i32) {
    %c0_i32 = arith.constant 0 : i32
    %c0_i32_0 = arith.constant 0 : i32
    %c0_i32_1 = arith.constant 0 : i32
    return %arg0, %c0_i32, %c0_i32_0 : i32, i32, i32
  }
  func.func @transform_4(%arg0: i32, %arg1: i32) -> (i32, i32, i32) {
    %c0_i32 = arith.constant 0 : i32
    %c0_i32_0 = arith.constant 0 : i32
    %c0_i32_1 = arith.constant 0 : i32
    return %arg0, %c0_i32, %c0_i32_0 : i32, i32, i32
  }
  func.func @transform_5(%arg0: i32, %arg1: i32) -> (i32, i32, i32) {
    %c0_i32 = arith.constant 0 : i32
    %c0_i32_0 = arith.constant 0 : i32
    %c0_i32_1 = arith.constant 0 : i32
    return %arg0, %c0_i32, %c0_i32_0 : i32, i32, i32
  }
  func.func @transform_6(%arg0: i32, %arg1: i32) -> (i32, i32, i32) {
    %c0_i32 = arith.constant 0 : i32
    %c0_i32_0 = arith.constant 0 : i32
    %c0_i32_1 = arith.constant 0 : i32
    return %arg0, %c0_i32, %c0_i32_0 : i32, i32, i32
  }
}

</mosaic_0001>

<llo_original>
// kernel: tpu_custom_call.1
$region0: #{tpu_custom_call.1}
  #allocation0 [shape = 'u32[]', space=smem, size = 0x4, offset = 0x4, fixed_abs, tag = 'smem constant byte address 0x4 - core index']
  #allocation1 [shape = 'u32[144,128]{1,0:T(1,128)}', space=vmem, size = 0x12000, scoped, tag = 'internal scratch']
  %s0 = inlined_call_operand.hbm [shape: f32[16,128], index: 0, kind: input, shape index: {}]
  %s1 = inlined_call_operand.hbm [shape: f32[16,128], index: 1, kind: input, shape index: {}]
  %s2 = inlined_call_operand.hbm [shape: f32[2,8,128], index: 2, kind: output, shape index: {0}]
  %s3 = inlined_call_operand.hbm [shape: f32[2,8,128], index: 3, kind: output, shape index: {1}]
  %s4 = inlined_call_operand.hbm [shape: f32[2,8,128], index: 4, kind: output, shape index: {2}]
  %s5 = inlined_call_operand.hbm [shape: f32[2,8,128], index: 5, kind: output, shape index: {3}]
  %s6 = inlined_call_operand.hbm [shape: f32[2,8,128], index: 6, kind: output, shape index: {4}]
  %7 = xla_tuple %s2, %s3, %s4, %s5, %s6
  %s8 = sld [smem:[#allocation0]]
  $region93: #{tpu_custom_call.1} parent=0
    _
  %s10 = ssub.s32 1, %s8
  %s11 = scalar_select 0, %s10, %s8
  $region1: #{tpu_custom_call.1} parent=0
    #allocation2 [shape = 'u8[8192]{0}', space=vmem, size = 0x2000, scoped, tag = 'input window, operand 0']
    #allocation3 [shape = 's32[2]{0}', space=sflag, size = 0x8, scoped, tag = 'scoped memory for tpu_custom_call.1']
    #allocation4 [shape = 's32[2]{0}', space=sflag, size = 0x8, scoped, tag = 'scoped memory for tpu_custom_call.1']
    #allocation5 [shape = 'u8[8192]{0}', space=vmem, size = 0x2000, scoped, tag = 'input window, operand 1']
    #allocation6 [shape = 's32[2]{0}', space=sflag, size = 0x8, scoped, tag = 'scoped memory for tpu_custom_call.1']
    #allocation7 [shape = 'u8[8192]{0}', space=vmem, size = 0x2000, scoped, tag = 'output window, operand 0']
    #allocation8 [shape = 'u8[8192]{0}', space=vmem, size = 0x2000, scoped, tag = 'output window, operand 1']
    #allocation9 [shape = 's32[2]{0}', space=sflag, size = 0x8, scoped, tag = 'scoped memory for tpu_custom_call.1']
    #allocation10 [shape = 'u8[8192]{0}', space=vmem, size = 0x2000, scoped, tag = 'output window, operand 2']
    #allocation11 [shape = 'u8[8192]{0}', space=vmem, size = 0x2000, scoped, tag = 'output window, operand 3']
    #allocation12 [shape = 's32[2]{0}', space=sflag, size = 0x8, scoped, tag = 'scoped memory for tpu_custom_call.1']
    #allocation13 [shape = 'u8[8192]{0}', space=vmem, size = 0x2000, scoped, tag = 'output window, operand 4']
    %12 = vsyncpa [#allocation3], 0
    %s13 = scalar_lea.sflag [#allocation3], 1
    %14 = vsyncpa %s13, 0
    %15 = vsyncpa [#allocation6], 0
    %s16 = scalar_lea.sflag [#allocation6], 1
    %17 = vsyncpa %s16, 0
    %18 = vsyncpa [#allocation4], 0
    %s19 = scalar_lea.sflag [#allocation4], 1
    %20 = vsyncpa %s19, 0
    %21 = vsyncpa [#allocation9], 0
    %s22 = scalar_lea.sflag [#allocation9], 1
    %23 = vsyncpa %s22, 0
    %24 = vsyncpa [#allocation12], 0
    %s25 = scalar_lea.sflag [#allocation12], 1
    %26 = vsyncpa %s25, 0
    loop: start=0, step=1, limit=4
    $region2: #{tpu_custom_call.1} parent=1 // loop_pre_header
      _
    $region3: #{tpu_custom_call.1} parent=1 // loop_header
      %s28 = sphi 0, %s32
      %p29 = scmp.ge.s32.totalorder %s28, 4
      %s35 = sphi 0, %s47
      %s36 = sphi 0, %s43
      %s37 = sphi 0, %s35
      %s38 = sphi 0, %s36
      %s39 = sphi 0, %s37
      %s40 = sphi 0, %s38
      %s56 = sphi 0, %s58
      %s59 = sphi 0, %s56
      %s60 = sphi 0, %s59
      %s76 = sphi 0, %s60
      %s88 = sphi 0, %s90
      %s91 = sphi 0, %s88
      %s92 = sphi 0, %s91
      %s108 = sphi 0, %s92
      %s114 = sphi 0, %s116
      %s117 = sphi 0, %s114
      %s118 = sphi 0, %s117
      %s134 = sphi 0, %s118
      %s140 = sphi 0, %s142
      %s143 = sphi 0, %s140
      %s144 = sphi 0, %s143
      %s160 = sphi 0, %s144
      %s166 = sphi 0, %s168
      %s169 = sphi 0, %s166
      %s170 = sphi 0, %s169
      %s186 = sphi 0, %s170
      %s192 = sphi 0, %s194
      %s195 = sphi 0, %s192
      %s196 = sphi 0, %s195
      %s212 = sphi 0, %s196
      %s218 = sphi 0, %s220
      %s221 = sphi 0, %s218
      %s222 = sphi 0, %s221
      %s238 = sphi 0, %s222
    $region4: #{tpu_custom_call.1} parent=1 // loop_header_branch
      %31 = sbr.rel (%p29) target = $region8
    $region5: #{tpu_custom_call.1} parent=1 // loop_body
      %s33 = ssub.s32 %s28, 1
      %s34 = ssub.s32 %s28, 2
      %s41 = sadd.s32 1, %s36
      %p42 = scmp.ge.s32.totalorder %s41, 1
      %s43 = scalar_select %p42, 0, %s41
      %s44 = sadd.s32 1, %s35
      %s45 = scalar_select %p42, %s44, %s35
      %p46 = scmp.ge.s32.totalorder %s45, 2
      %s47 = scalar_select %p46, 0, %s45
      %s48 = sadd.s32 %s35, %s36
      %p49 = scmp.lt.s32.totalorder %s48, 1
      %s50 = scalar_select %p49, %s48, 1
      %s51 = sadd.s32 %s47, %s43
      %p52 = scmp.lt.s32.totalorder %s51, 1
      %s53 = scalar_select %p52, %s51, 1
      %s54 = ssub.s32 %s50, %s53
      %p55 = scmp.eq.s32.totalorder %s54, 0
      %s57 = sadd.s32 %s56, 1
      %s58 = scalar_select %p55, %s56, %s57
      %p61 = pneg %p55
      %p62 = scmp.eq.s32.totalorder %s28, 1
      %p63 = por %p61, %p62
      %p64 = scmp.ne.s32.totalorder %s56, %s59
      %p65 = scmp.eq.s32.totalorder %s28, 0
      %p66 = por %p64, %p65
      %p67 = scmp.ne.s32.totalorder %s56, %s59
      %p68 = scmp.eq.s32.totalorder %s33, 1
      %p69 = por %p67, %p68
      %p70 = scmp.ne.s32.totalorder %s59, %s60
      %p71 = scmp.eq.s32.totalorder %s33, 0
      %p72 = por %p70, %p71
      %p73 = scmp.ne.s32.totalorder %s59, %s60
      %p74 = scmp.eq.s32.totalorder %s34, 1
      %p75 = por %p73, %p74
      %p77 = scmp.ne.s32.totalorder %s60, %s76
      %p78 = scmp.eq.s32.totalorder %s34, 0
      %p79 = por %p77, %p78
      %s80 = sadd.s32 %s35, %s36
      %p81 = scmp.lt.s32.totalorder %s80, 1
      %s82 = scalar_select %p81, %s80, 1
      %s83 = sadd.s32 %s47, %s43
      %p84 = scmp.lt.s32.totalorder %s83, 1
      %s85 = scalar_select %p84, %s83, 1
      %s86 = ssub.s32 %s82, %s85
      %p87 = scmp.eq.s32.totalorder %s86, 0
      %s89 = sadd.s32 %s88, 1
      %s90 = scalar_select %p87, %s88, %s89
      %p93 = pneg %p87
      %p94 = scmp.eq.s32.totalorder %s28, 1
      %p95 = por %p93, %p94
      %p96 = scmp.ne.s32.totalorder %s88, %s91
      %p97 = scmp.eq.s32.totalorder %s28, 0
      %p98 = por %p96, %p97
      %p99 = scmp.ne.s32.totalorder %s88, %s91
      %p100 = scmp.eq.s32.totalorder %s33, 1
      %p101 = por %p99, %p100
      %p102 = scmp.ne.s32.totalorder %s91, %s92
      %p103 = scmp.eq.s32.totalorder %s33, 0
      %p104 = por %p102, %p103
      %p105 = scmp.ne.s32.totalorder %s91, %s92
      %p106 = scmp.eq.s32.totalorder %s34, 1
      %p107 = por %p105, %p106
      %p109 = scmp.ne.s32.totalorder %s92, %s108
      %p110 = scmp.eq.s32.totalorder %s34, 0
      %p111 = por %p109, %p110
      %s112 = ssub.s32 %s35, %s47
      %p113 = scmp.eq.s32.totalorder %s112, 0
      %s115 = sadd.s32 %s114, 1
      %s116 = scalar_select %p113, %s114, %s115
      %p119 = pneg %p113
      %p120 = scmp.eq.s32.totalorder %s28, 1
      %p121 = por %p119, %p120
      %p122 = scmp.ne.s32.totalorder %s114, %s117
      %p123 = scmp.eq.s32.totalorder %s28, 0
      %p124 = por %p122, %p123
      %p125 = scmp.ne.s32.totalorder %s114, %s117
      %p126 = scmp.eq.s32.totalorder %s33, 1
      %p127 = por %p125, %p126
      %p128 = scmp.ne.s32.totalorder %s117, %s118
      %p129 = scmp.eq.s32.totalorder %s33, 0
      %p130 = por %p128, %p129
      %p131 = scmp.ne.s32.totalorder %s117, %s118
      %p132 = scmp.eq.s32.totalorder %s34, 1
      %p133 = por %p131, %p132
      %p135 = scmp.ne.s32.totalorder %s118, %s134
      %p136 = scmp.eq.s32.totalorder %s34, 0
      %p137 = por %p135, %p136
      %s138 = ssub.s32 %s35, %s47
      %p139 = scmp.eq.s32.totalorder %s138, 0
      %s141 = sadd.s32 %s140, 1
      %s142 = scalar_select %p139, %s140, %s141
      %p145 = pneg %p139
      %p146 = scmp.eq.s32.totalorder %s28, 1
      %p147 = por %p145, %p146
      %p148 = scmp.ne.s32.totalorder %s140, %s143
      %p149 = scmp.eq.s32.totalorder %s28, 0
      %p150 = por %p148, %p149
      %p151 = scmp.ne.s32.totalorder %s140, %s143
      %p152 = scmp.eq.s32.totalorder %s33, 1
      %p153 = por %p151, %p152
      %p154 = scmp.ne.s32.totalorder %s143, %s144
      %p155 = scmp.eq.s32.totalorder %s33, 0
      %p156 = por %p154, %p155
      %p157 = scmp.ne.s32.totalorder %s143, %s144
      %p158 = scmp.eq.s32.totalorder %s34, 1
      %p159 = por %p157, %p158
      %p161 = scmp.ne.s32.totalorder %s144, %s160
      %p162 = scmp.eq.s32.totalorder %s34, 0
      %p163 = por %p161, %p162
      %s164 = ssub.s32 %s35, %s47
      %p165 = scmp.eq.s32.totalorder %s164, 0
      %s167 = sadd.s32 %s166, 1
      %s168 = scalar_select %p165, %s166, %s167
      %p171 = pneg %p165
      %p172 = scmp.eq.s32.totalorder %s28, 1
      %p173 = por %p171, %p172
      %p174 = scmp.ne.s32.totalorder %s166, %s169
      %p175 = scmp.eq.s32.totalorder %s28, 0
      %p176 = por %p174, %p175
      %p177 = scmp.ne.s32.totalorder %s166, %s169
      %p178 = scmp.eq.s32.totalorder %s33, 1
      %p179 = por %p177, %p178
      %p180 = scmp.ne.s32.totalorder %s169, %s170
      %p181 = scmp.eq.s32.totalorder %s33, 0
      %p182 = por %p180, %p181
      %p183 = scmp.ne.s32.totalorder %s169, %s170
      %p184 = scmp.eq.s32.totalorder %s34, 1
      %p185 = por %p183, %p184
      %p187 = scmp.ne.s32.totalorder %s170, %s186
      %p188 = scmp.eq.s32.totalorder %s34, 0
      %p189 = por %p187, %p188
      %s190 = ssub.s32 %s35, %s47
      %p191 = scmp.eq.s32.totalorder %s190, 0
      %s193 = sadd.s32 %s192, 1
      %s194 = scalar_select %p191, %s192, %s193
      %p197 = pneg %p191
      %p198 = scmp.eq.s32.totalorder %s28, 1
      %p199 = por %p197, %p198
      %p200 = scmp.ne.s32.totalorder %s192, %s195
      %p201 = scmp.eq.s32.totalorder %s28, 0
      %p202 = por %p200, %p201
      %p203 = scmp.ne.s32.totalorder %s192, %s195
      %p204 = scmp.eq.s32.totalorder %s33, 1
      %p205 = por %p203, %p204
      %p206 = scmp.ne.s32.totalorder %s195, %s196
      %p207 = scmp.eq.s32.totalorder %s33, 0
      %p208 = por %p206, %p207
      %p209 = scmp.ne.s32.totalorder %s195, %s196
      %p210 = scmp.eq.s32.totalorder %s34, 1
      %p211 = por %p209, %p210
      %p213 = scmp.ne.s32.totalorder %s196, %s212
      %p214 = scmp.eq.s32.totalorder %s34, 0
      %p215 = por %p213, %p214
      %s216 = ssub.s32 %s35, %s47
      %p217 = scmp.eq.s32.totalorder %s216, 0
      %s219 = sadd.s32 %s218, 1
      %s220 = scalar_select %p217, %s218, %s219
      %p223 = pneg %p217
      %p224 = scmp.eq.s32.totalorder %s28, 1
      %p225 = por %p223, %p224
      %p226 = scmp.ne.s32.totalorder %s218, %s221
      %p227 = scmp.eq.s32.totalorder %s28, 0
      %p228 = por %p226, %p227
      %p229 = scmp.ne.s32.totalorder %s218, %s221
      %p230 = scmp.eq.s32.totalorder %s33, 1
      %p231 = por %p229, %p230
      %p232 = scmp.ne.s32.totalorder %s221, %s222
      %p233 = scmp.eq.s32.totalorder %s33, 0
      %p234 = por %p232, %p233
      %p235 = scmp.ne.s32.totalorder %s221, %s222
      %p236 = scmp.eq.s32.totalorder %s34, 1
      %p237 = por %p235, %p236
      %p239 = scmp.ne.s32.totalorder %s222, %s238
      %p240 = scmp.eq.s32.totalorder %s34, 0
      %p241 = por %p239, %p240
      %p242 = scmp.le.s32.totalorder 1, %s28
      %p243 = scmp.lt.s32.totalorder %s28, 3
      %p244 = pnand %p242, %p243
      %p245 = pneg %p244
      // Predicated region
      $region9: #{tpu_custom_call.1} parent=5 // pred_check
        _
      $region10: #{tpu_custom_call.1} parent=5 // pred_check_branch
        %247 = sbr.rel (%p244) target = $region12
      $region11: #{tpu_custom_call.1} parent=5 // pred_region
        %s248 = ssub.s32 %s28, 1
      $region12: #{tpu_custom_call.1} parent=5 // pred_fallthru
        _
      %p249 = scmp.lt.s32.totalorder %s28, 2
      // Predicated region
      $region13: #{tpu_custom_call.1} parent=5 // pred_check
        %p250 = pneg %p249
      $region14: #{tpu_custom_call.1} parent=5 // pred_check_branch
        %252 = sbr.rel (%p250) target = $region16
      $region15: #{tpu_custom_call.1} parent=5 // pred_region
        // Predicated region
        $region17: #{tpu_custom_call.1} parent=15 // pred_check
          %p253 = pneg %p66
        $region18: #{tpu_custom_call.1} parent=15 // pred_check_branch
          %255 = sbr.rel (%p253) target = $region20
        $region19: #{tpu_custom_call.1} parent=15 // pred_region
          %s256 = sand.u32 %s56, 1
          %s257 = scalar_lea.sflag [#allocation3], %s256
          %s258 = sand.u32 %s56, 1
          %s259 = smul.addr %s258, 8
          %s260 = scalar_lea.vmem [#allocation2], %s259
          %s261 = sadd.s32 %s35, %s36
          %p262 = scmp.lt.s32.totalorder %s261, 1
          %s263 = scalar_select %p262, %s261, 1
          %s265 = ssub.s32 128, 128
          %266 = vsyncadd %s257, %s265
          %s267 = smul.addr %s263, 128
          %s268 = scalar_lea.hbm %s0, %s267
          %s270 = sshll.u32 %s260, 4
          %s271 = int_to_ptr.vmem [resolvable:$true] %s270
          %273 = dma.hbm_to_vmem [thread:$0]  %s268, 128, %s271, %s257
        $region20: #{tpu_custom_call.1} parent=15 // pred_fallthru
          _
        // Predicated region
        $region21: #{tpu_custom_call.1} parent=15 // pred_check
          %p274 = pneg %p98
        $region22: #{tpu_custom_call.1} parent=15 // pred_check_branch
          %276 = sbr.rel (%p274) target = $region24
        $region23: #{tpu_custom_call.1} parent=15 // pred_region
          %s277 = sand.u32 %s88, 1
          %s278 = scalar_lea.sflag [#allocation6], %s277
          %s279 = sand.u32 %s88, 1
          %s280 = smul.addr %s279, 8
          %s281 = scalar_lea.vmem [#allocation5], %s280
          %s282 = sadd.s32 %s35, %s36
          %p283 = scmp.lt.s32.totalorder %s282, 1
          %s284 = scalar_select %p283, %s282, 1
          %s286 = ssub.s32 128, 128
          %287 = vsyncadd %s278, %s286
          %s288 = smul.addr %s284, 128
          %s289 = scalar_lea.hbm %s1, %s288
          %s291 = sshll.u32 %s281, 4
          %s292 = int_to_ptr.vmem [resolvable:$true] %s291
          %294 = dma.hbm_to_vmem [thread:$0]  %s289, 128, %s292, %s278
        $region24: #{tpu_custom_call.1} parent=15 // pred_fallthru
          _
      $region16: #{tpu_custom_call.1} parent=5 // pred_fallthru
        _
      %p295 = scmp.le.s32.totalorder 1, %s28
      %p296 = scmp.lt.s32.totalorder %s28, 3
      %p297 = pnand %p295, %p296
      %p298 = pneg %p297
      // Predicated region
      $region25: #{tpu_custom_call.1} parent=5 // pred_check
        _
      $region26: #{tpu_custom_call.1} parent=5 // pred_check_branch
        %300 = sbr.rel (%p297) target = $region28
      $region27: #{tpu_custom_call.1} parent=5 // pred_region
        %s301 = ssub.s32 %s28, 1
        %s302 = sand.u32 %s59, 1
        %s303 = scalar_lea.sflag [#allocation3], %s302
        %s304 = sand.u32 %s59, 1
        %s305 = smul.addr %s304, 8
        %s306 = scalar_lea.vmem [#allocation2], %s305
        // Predicated region
        $region29: #{tpu_custom_call.1} parent=27 // pred_check
          %p307 = pneg %p72
        $region30: #{tpu_custom_call.1} parent=27 // pred_check_branch
          %309 = sbr.rel (%p307) target = $region32
        $region31: #{tpu_custom_call.1} parent=27 // pred_region
          %310 = dma.done %s303, 128
        $region32: #{tpu_custom_call.1} parent=27 // pred_fallthru
          _
        %s311 = sand.u32 %s91, 1
        %s312 = scalar_lea.sflag [#allocation6], %s311
        %s313 = sand.u32 %s91, 1
        %s314 = smul.addr %s313, 8
        %s315 = scalar_lea.vmem [#allocation5], %s314
        // Predicated region
        $region33: #{tpu_custom_call.1} parent=27 // pred_check
          %p316 = pneg %p104
        $region34: #{tpu_custom_call.1} parent=27 // pred_check_branch
          %318 = sbr.rel (%p316) target = $region36
        $region35: #{tpu_custom_call.1} parent=27 // pred_region
          %319 = dma.done %s312, 128
        $region36: #{tpu_custom_call.1} parent=27 // pred_fallthru
          _
        %s320 = sand.u32 %s59, 1
        %s321 = scalar_lea.sflag [#allocation3], %s320
        %s322 = sand.u32 %s59, 1
        %s323 = smul.addr %s322, 8
        %s324 = scalar_lea.vmem [#allocation2], %s323
        %p325 = pneg %p72
        %p326 = pneg %p69
        %s327 = sand.u32 %s91, 1
        %s328 = scalar_lea.sflag [#allocation6], %s327
        %s329 = sand.u32 %s91, 1
        %s330 = smul.addr %s329, 8
        %s331 = scalar_lea.vmem [#allocation5], %s330
        %p332 = pneg %p104
        %p333 = pneg %p101
        %p334 = pneg %p130
        %p335 = pneg %p127
        %s336 = sand.u32 %s117, 1
        %s337 = scalar_lea.sflag [#allocation4], %s336
        %s338 = sand.u32 %s117, 1
        %s339 = smul.addr %s338, 8
        %s340 = scalar_lea.vmem [#allocation7], %s339
        %p341 = pneg %p156
        %p342 = pneg %p153
        %s343 = sand.u32 %s33, 1
        %s344 = scalar_lea.sflag [#allocation9], %s343
        %s345 = sand.u32 %s143, 1
        %s346 = smul.addr %s345, 8
        %s347 = scalar_lea.vmem [#allocation8], %s346
        %p348 = pneg %p182
        %p349 = pneg %p179
        %s350 = sand.u32 %s33, 1
        %s351 = scalar_lea.sflag [#allocation9], %s350
        %s352 = sand.u32 %s169, 1
        %s353 = smul.addr %s352, 8
        %s354 = scalar_lea.vmem [#allocation10], %s353
        %p355 = pneg %p208
        %p356 = pneg %p205
        %s357 = sand.u32 %s33, 1
        %s358 = scalar_lea.sflag [#allocation12], %s357
        %s359 = sand.u32 %s195, 1
        %s360 = smul.addr %s359, 8
        %s361 = scalar_lea.vmem [#allocation11], %s360
        %p362 = pneg %p234
        %p363 = pneg %p231
        %s364 = sand.u32 %s33, 1
        %s365 = scalar_lea.sflag [#allocation12], %s364
        %s366 = sand.u32 %s221, 1
        %s367 = smul.addr %s366, 8
        %s368 = scalar_lea.vmem [#allocation13], %s367
        %s369 = sadd.s32 %s37, %s38
        %p370 = scmp.lt.s32.totalorder %s369, 1
        %s371 = scalar_select %p370, %s369, 1
        %s372 = sadd.s32 %s37, %s38
        %p373 = scmp.lt.s32.totalorder %s372, 1
        %s374 = scalar_select %p373, %s372, 1
        %s375 = sadd.s32 %s37, %s38
        %p376 = scmp.eq.s32.totalorder %s38, 0
        // Predicated region
        $region37: #{tpu_custom_call.1} parent=27 // pred_check
          %p377 = pneg %p376
        $region38: #{tpu_custom_call.1} parent=27 // pred_check_branch
          %379 = sbr.rel (%p377) target = $region40
        $region39: #{tpu_custom_call.1} parent=27 // pred_region
          %380 = vst [vmem:[%s340] sm:$0xff] 0.0
          %381 = vst [vmem:[%s347] sm:$0xff] 0.0
          %382 = vst [vmem:[%s354] sm:$0xff] 0.0
          %383 = vst [vmem:[%s361] sm:$0xff] 0.0
          %384 = vst [vmem:[%s368] sm:$0xff] 0.0
        $region40: #{tpu_custom_call.1} parent=27 // pred_fallthru
          _
        %p385 = scmp.lt.s32.totalorder %s375, 2
        // Predicated region
        $region41: #{tpu_custom_call.1} parent=27 // pred_check
          %p386 = pneg %p385
        $region42: #{tpu_custom_call.1} parent=27 // pred_check_branch
          %388 = sbr.rel (%p386) target = $region44
        $region43: #{tpu_custom_call.1} parent=27 // pred_region
          %v389 = vld [vmem:[%s306] sm:$0xff]
          %v390 = vld [vmem:[%s315] sm:$0xff]
          %v391 = vld [vmem:[%s340] sm:$0xff]
          %v392 = vadd.f32 %v389, 0.0
          %v393 = vadd.f32 %v391, %v392
          %394 = vst [vmem:[%s340] sm:$0xff] %v393
          %v395 = vld [vmem:[%s347] sm:$0xff]
          %v396 = vadd.f32 %v390, 0.0
          %v397 = vadd.f32 %v395, %v396
          %398 = vst [vmem:[%s347] sm:$0xff] %v397
          %v399 = vld [vmem:[%s354] sm:$0xff]
          %v400 = vmul.f32 %v389, %v389
          %v401 = vadd.f32 %v400, 0.0
          %v402 = vadd.f32 %v399, %v401
          %403 = vst [vmem:[%s354] sm:$0xff] %v402
          %v404 = vld [vmem:[%s361] sm:$0xff]
          %v405 = vmul.f32 %v390, %v390
          %v406 = vadd.f32 %v405, 0.0
          %v407 = vadd.f32 %v404, %v406
          %408 = vst [vmem:[%s361] sm:$0xff] %v407
          %v409 = vld [vmem:[%s368] sm:$0xff]
          %v410 = vmul.f32 %v389, %v390
          %v411 = vadd.f32 %v410, 0.0
          %v412 = vadd.f32 %v409, %v411
          %413 = vst [vmem:[%s368] sm:$0xff] %v412
        $region44: #{tpu_custom_call.1} parent=27 // pred_fallthru
          _
        %p414 = scmp.eq.s32.totalorder %s375, 2
        // Predicated region
        $region45: #{tpu_custom_call.1} parent=27 // pred_check
          %p415 = pneg %p414
        $region46: #{tpu_custom_call.1} parent=27 // pred_check_branch
          %417 = sbr.rel (%p415) target = $region48
        $region47: #{tpu_custom_call.1} parent=27 // pred_region
          %v418 = vlaneseq
          %v419 = vshrl.u32 %v418, 7
          %s420 = smul.u32 %s375, 8
          %s421 = ssub.s32 16, %s420
          %v422 = vstv %s421
          %vm423 = vcmp.lt.s32.totalorder %v419, %v422
          %v424 = vld [vmem:[%s306] sm:$0xff]
          %v425 = vsel %vm423, %v424, 0.0
          %v426 = vld [vmem:[%s315] sm:$0xff]
          %v427 = vsel %vm423, %v426, 0.0
          %v428 = vld [vmem:[%s340] sm:$0xff]
          %v429 = vadd.f32 %v425, 0.0
          %v430 = vadd.f32 %v428, %v429
          %431 = vst [vmem:[%s340] sm:$0xff] %v430
          %v432 = vld [vmem:[%s347] sm:$0xff]
          %v433 = vadd.f32 %v427, 0.0
          %v434 = vadd.f32 %v432, %v433
          %435 = vst [vmem:[%s347] sm:$0xff] %v434
          %v436 = vld [vmem:[%s354] sm:$0xff]
          %v437 = vmul.f32 %v425, %v425
          %v438 = vadd.f32 %v437, 0.0
          %v439 = vadd.f32 %v436, %v438
          %440 = vst [vmem:[%s354] sm:$0xff] %v439
          %v441 = vld [vmem:[%s361] sm:$0xff]
          %v442 = vmul.f32 %v427, %v427
          %v443 = vadd.f32 %v442, 0.0
          %v444 = vadd.f32 %v441, %v443
          %445 = vst [vmem:[%s361] sm:$0xff] %v444
          %v446 = vld [vmem:[%s368] sm:$0xff]
          %v447 = vmul.f32 %v425, %v427
          %v448 = vadd.f32 %v447, 0.0
          %v449 = vadd.f32 %v446, %v448
          %450 = vst [vmem:[%s368] sm:$0xff] %v449
        $region48: #{tpu_custom_call.1} parent=27 // pred_fallthru
          _
        %s451 = sand.u32 %s117, 1
        %s452 = scalar_lea.sflag [#allocation4], %s451
        %s453 = sand.u32 %s117, 1
        %s454 = smul.addr %s453, 8
        %s455 = scalar_lea.vmem [#allocation7], %s454
        %s456 = sand.u32 %s33, 1
        %s457 = scalar_lea.sflag [#allocation9], %s456
        %s458 = sand.u32 %s143, 1
        %s459 = smul.addr %s458, 8
        %s460 = scalar_lea.vmem [#allocation8], %s459
        %s461 = sand.u32 %s33, 1
        %s462 = scalar_lea.sflag [#allocation9], %s461
        %s463 = sand.u32 %s169, 1
        %s464 = smul.addr %s463, 8
        %s465 = scalar_lea.vmem [#allocation10], %s464
        %s466 = sand.u32 %s33, 1
        %s467 = scalar_lea.sflag [#allocation12], %s466
        %s468 = sand.u32 %s195, 1
        %s469 = smul.addr %s468, 8
        %s470 = scalar_lea.vmem [#allocation11], %s469
        %s471 = sand.u32 %s33, 1
        %s472 = scalar_lea.sflag [#allocation12], %s471
        %s473 = sand.u32 %s221, 1
        %s474 = smul.addr %s473, 8
        %s475 = scalar_lea.vmem [#allocation13], %s474
        // Predicated region
        $region49: #{tpu_custom_call.1} parent=27 // pred_check
          %p476 = pneg %p127
        $region50: #{tpu_custom_call.1} parent=27 // pred_check_branch
          %478 = sbr.rel (%p476) target = $region52
        $region51: #{tpu_custom_call.1} parent=27 // pred_region
          %s480 = ssub.s32 128, 128
          %481 = vsyncadd %s452, %s480
          %s482 = smul.addr %s37, 128
          %s483 = scalar_lea.hbm %s2, %s482
          %s485 = sshll.u32 %s455, 4
          %s486 = int_to_ptr.vmem [resolvable:$true] %s485
          %488 = dma.vmem_to_hbm [thread:$0]  %s486, 128, %s483, %s452
        $region52: #{tpu_custom_call.1} parent=27 // pred_fallthru
          _
        // Predicated region
        $region53: #{tpu_custom_call.1} parent=27 // pred_check
          %p489 = pneg %p153
        $region54: #{tpu_custom_call.1} parent=27 // pred_check_branch
          %491 = sbr.rel (%p489) target = $region56
        $region55: #{tpu_custom_call.1} parent=27 // pred_region
          %s493 = ssub.s32 128, 128
          %494 = vsyncadd %s457, %s493
          %s495 = smul.addr %s37, 128
          %s496 = scalar_lea.hbm %s3, %s495
          %s498 = sshll.u32 %s460, 4
          %s499 = int_to_ptr.vmem [resolvable:$true] %s498
          %501 = dma.vmem_to_hbm [thread:$0]  %s499, 128, %s496, %s457
        $region56: #{tpu_custom_call.1} parent=27 // pred_fallthru
          _
        // Predicated region
        $region57: #{tpu_custom_call.1} parent=27 // pred_check
          %p502 = pneg %p179
        $region58: #{tpu_custom_call.1} parent=27 // pred_check_branch
          %504 = sbr.rel (%p502) target = $region60
        $region59: #{tpu_custom_call.1} parent=27 // pred_region
          %s506 = ssub.s32 128, 128
          %507 = vsyncadd %s462, %s506
          %s508 = smul.addr %s37, 128
          %s509 = scalar_lea.hbm %s4, %s508
          %s511 = sshll.u32 %s465, 4
          %s512 = int_to_ptr.vmem [resolvable:$true] %s511
          %514 = dma.vmem_to_hbm [thread:$0]  %s512, 128, %s509, %s462
        $region60: #{tpu_custom_call.1} parent=27 // pred_fallthru
          _
        // Predicated region
        $region61: #{tpu_custom_call.1} parent=27 // pred_check
          %p515 = pneg %p205
        $region62: #{tpu_custom_call.1} parent=27 // pred_check_branch
          %517 = sbr.rel (%p515) target = $region64
        $region63: #{tpu_custom_call.1} parent=27 // pred_region
          %s519 = ssub.s32 128, 128
          %520 = vsyncadd %s467, %s519
          %s521 = smul.addr %s37, 128
          %s522 = scalar_lea.hbm %s5, %s521
          %s524 = sshll.u32 %s470, 4
          %s525 = int_to_ptr.vmem [resolvable:$true] %s524
          %527 = dma.vmem_to_hbm [thread:$0]  %s525, 128, %s522, %s467
        $region64: #{tpu_custom_call.1} parent=27 // pred_fallthru
          _
        // Predicated region
        $region65: #{tpu_custom_call.1} parent=27 // pred_check
          %p528 = pneg %p231
        $region66: #{tpu_custom_call.1} parent=27 // pred_check_branch
          %530 = sbr.rel (%p528) target = $region68
        $region67: #{tpu_custom_call.1} parent=27 // pred_region
          %s532 = ssub.s32 128, 128
          %533 = vsyncadd %s472, %s532
          %s534 = smul.addr %s37, 128
          %s535 = scalar_lea.hbm %s6, %s534
          %s537 = sshll.u32 %s475, 4
          %s538 = int_to_ptr.vmem [resolvable:$true] %s537
          %540 = dma.vmem_to_hbm [thread:$0]  %s538, 128, %s535, %s472
        $region68: #{tpu_custom_call.1} parent=27 // pred_fallthru
          _
      $region28: #{tpu_custom_call.1} parent=5 // pred_fallthru
        _
      %p541 = scmp.le.s32.totalorder 2, %s28
      // Predicated region
      $region69: #{tpu_custom_call.1} parent=5 // pred_check
        %p542 = pneg %p541
      $region70: #{tpu_custom_call.1} parent=5 // pred_check_branch
        %544 = sbr.rel (%p542) target = $region72
      $region71: #{tpu_custom_call.1} parent=5 // pred_region
        %s545 = ssub.s32 %s28, 2
        // Predicated region
        $region73: #{tpu_custom_call.1} parent=71 // pred_check
          %p546 = pneg %p133
        $region74: #{tpu_custom_call.1} parent=71 // pred_check_branch
          %548 = sbr.rel (%p546) target = $region76
        $region75: #{tpu_custom_call.1} parent=71 // pred_region
          %s549 = sand.u32 %s118, 1
          %s550 = scalar_lea.sflag [#allocation4], %s549
          %s551 = sand.u32 %s118, 1
          %s552 = smul.addr %s551, 8
          %s553 = scalar_lea.vmem [#allocation7], %s552
          %554 = dma.done %s550, 128
        $region76: #{tpu_custom_call.1} parent=71 // pred_fallthru
          _
        // Predicated region
        $region77: #{tpu_custom_call.1} parent=71 // pred_check
          %p555 = pneg %p159
        $region78: #{tpu_custom_call.1} parent=71 // pred_check_branch
          %557 = sbr.rel (%p555) target = $region80
        $region79: #{tpu_custom_call.1} parent=71 // pred_region
          %s558 = sand.u32 %s34, 1
          %s559 = scalar_lea.sflag [#allocation9], %s558
          %s560 = sand.u32 %s144, 1
          %s561 = smul.addr %s560, 8
          %s562 = scalar_lea.vmem [#allocation8], %s561
          %563 = dma.done %s559, 128
        $region80: #{tpu_custom_call.1} parent=71 // pred_fallthru
          _
        // Predicated region
        $region81: #{tpu_custom_call.1} parent=71 // pred_check
          %p564 = pneg %p185
        $region82: #{tpu_custom_call.1} parent=71 // pred_check_branch
          %566 = sbr.rel (%p564) target = $region84
        $region83: #{tpu_custom_call.1} parent=71 // pred_region
          %s567 = sand.u32 %s34, 1
          %s568 = scalar_lea.sflag [#allocation9], %s567
          %s569 = sand.u32 %s170, 1
          %s570 = smul.addr %s569, 8
          %s571 = scalar_lea.vmem [#allocation10], %s570
          %572 = dma.done %s568, 128
        $region84: #{tpu_custom_call.1} parent=71 // pred_fallthru
          _
        // Predicated region
        $region85: #{tpu_custom_call.1} parent=71 // pred_check
          %p573 = pneg %p211
        $region86: #{tpu_custom_call.1} parent=71 // pred_check_branch
          %575 = sbr.rel (%p573) target = $region88
        $region87: #{tpu_custom_call.1} parent=71 // pred_region
          %s576 = sand.u32 %s34, 1
          %s577 = scalar_lea.sflag [#allocation12], %s576
          %s578 = sand.u32 %s196, 1
          %s579 = smul.addr %s578, 8
          %s580 = scalar_lea.vmem [#allocation11], %s579
          %581 = dma.done %s577, 128
        $region88: #{tpu_custom_call.1} parent=71 // pred_fallthru
          _
        // Predicated region
        $region89: #{tpu_custom_call.1} parent=71 // pred_check
          %p582 = pneg %p237
        $region90: #{tpu_custom_call.1} parent=71 // pred_check_branch
          %584 = sbr.rel (%p582) target = $region92
        $region91: #{tpu_custom_call.1} parent=71 // pred_region
          %s585 = sand.u32 %s34, 1
          %s586 = scalar_lea.sflag [#allocation12], %s585
          %s587 = sand.u32 %s222, 1
          %s588 = smul.addr %s587, 8
          %s589 = scalar_lea.vmem [#allocation13], %s588
          %590 = dma.done %s586, 128
        $region92: #{tpu_custom_call.1} parent=71 // pred_fallthru
          _
      $region72: #{tpu_custom_call.1} parent=5 // pred_fallthru
        _
    $region6: #{tpu_custom_call.1} parent=1 // loop_footer
      %s32 = sadd.s32 1, %s28
    $region7: #{tpu_custom_call.1} parent=1 // loop_footer_branch
      %27 = sbr.rel target = $region3
    $region8: #{tpu_custom_call.1} parent=1 // loop_exit
      _
    %591 = vsyncpa [#allocation3], 1
    %s592 = scalar_lea.sflag [#allocation3], 1
    %593 = vsyncpa %s592, 1
    %594 = vsyncpa [#allocation6], 1
    %s595 = scalar_lea.sflag [#allocation6], 1
    %596 = vsyncpa %s595, 1
    %597 = vsyncpa [#allocation4], 1
    %s598 = scalar_lea.sflag [#allocation4], 1
    %599 = vsyncpa %s598, 1
    %600 = vsyncpa [#allocation9], 1
    %s601 = scalar_lea.sflag [#allocation9], 1
    %602 = vsyncpa %s601, 1
    %603 = vsyncpa [#allocation12], 1
    %s604 = scalar_lea.sflag [#allocation12], 1
    %605 = vsyncpa %s604, 1

</llo_original>
